<compile_context>
chip_gen: v5e
topology: v5e:2x2
jax: 0.10.0
libtpu: 0.0.40
codegen_flags: <defaults>
</compile_context>

<pallas_src>
import jax
import jax.numpy as jnp
from jax.experimental import pallas as pl
from jax.experimental.pallas import tpu as pltpu


def gnnp_kernel(x_ref, adj_ref, w_ref, b3_ref, out_ref):
    """Fused GNNp forward, node-major layout, pure f32.

    x:   [N, C] f32     adj: [N, N] f32
    w:   [3, H, H] f32  packed (slot0 rows :C = W1 [C,H], slot1 = W2 [H,H],
                                slot2 cols :C = W3^T [H,C]; rest zero-padded)
    b3:  [1, C] f32
    out: [N, C] f32
    """
    f32 = jnp.float32
    class_num = b3_ref.shape[1]

    x = x_ref[...]                       # [N, C]
    adj = adj_ref[...]                   # [N, N]

    w1 = w_ref[0][:class_num, :]         # [C, H]  (static sublane slice)
    w2 = w_ref[1]                        # [H, H]
    w3t = w_ref[2][:, :class_num]        # [H, C]  (static lane slice)

    # --- GConv m1, reassociated as (adj @ x) @ W1 (C < H saves the N^2*H dot)
    t = jnp.dot(adj, x, preferred_element_type=f32)                     # [N, C]
    h = jnp.maximum(jnp.dot(t, w1, preferred_element_type=f32), 0.0)    # [N, H]

    # (input / hidden dropout layers are identity at inference time)

    # --- GConv m2:  adj @ (h1 @ W2)  (same association as the PyTorch module)
    t = jnp.dot(h, w2, preferred_element_type=f32)                      # [N, H]
    h = jnp.maximum(jnp.dot(adj, t, preferred_element_type=f32), 0.0)   # [N, H]

    # --- Linear m3:  h2 @ W3^T + b3  (output emitted directly as [N, C]) ----
    logits = jnp.dot(h, w3t, preferred_element_type=f32)                # [N, C]
    out_ref[...] = logits + b3_ref[...]


def prepare_gnnp_params(adj, w1, w2, w3, b3):
    """One-time preprocessing of the constant operands (outside the jit path).

    torch layouts: w1 [C, H], w2 [H, H], w3 (nn.Linear weight) [C, H], b3 [C].
    Returns (adj_f32, w_packed [3,H,H] f32, b3_row [1,C] f32).
    """
    f32 = jnp.float32
    hidden = w2.shape[0]
    class_num = w3.shape[0]

    w_packed = jnp.zeros((3, hidden, hidden), dtype=f32)
    w_packed = w_packed.at[0, :class_num, :].set(w1.astype(f32))      # W1   [C,H]
    w_packed = w_packed.at[1].set(w2.astype(f32))                     # W2   [H,H]
    w_packed = w_packed.at[2, :, :class_num].set(w3.astype(f32).T)    # W3^T [H,C]

    b3_row = b3.astype(f32).reshape(1, class_num)
    return adj.astype(f32), w_packed, b3_row


@jax.jit
def gnnp_forward(x, adj, w_packed, b3_row):
    """x:[N,C] f32, adj:[N,N] f32, w_packed:[3,H,H] f32, b3_row:[1,C] f32."""
    n, class_num = x.shape[0], b3_row.shape[1]
    hidden = w_packed.shape[1]

    flops = 2 * (n * n * class_num        # adj @ x
                 + n * class_num * hidden  # (adj x) @ W1
                 + n * hidden * hidden     # h1 @ W2
                 + n * n * hidden          # adj @ (h1 W2)
                 + n * hidden * class_num)  # h2 @ W3^T
    bytes_accessed = 4 * (x.size + adj.size + w_packed.size
                          + b3_row.size + n * class_num)

    vmem = pl.BlockSpec(memory_space=pltpu.MemorySpace.VMEM)
    return pl.pallas_call(
        gnnp_kernel,
        out_shape=jax.ShapeDtypeStruct((n, class_num), jnp.float32),
        in_specs=[vmem, vmem, vmem, vmem],
        out_specs=vmem,
        cost_estimate=pl.CostEstimate(flops=flops, transcendentals=0,
                                      bytes_accessed=bytes_accessed),
        compiler_params=pltpu.CompilerParams(vmem_limit_bytes=4 * 1024 * 1024),
    )(x, adj, w_packed, b3_row)


def reference_forward_f32(x, adj, w1, w2, w3, b3):
    """Pure-JAX f32 reference matching the PyTorch module (inference mode)."""
    hp = jax.lax.Precision.HIGHEST
    h = jnp.maximum(jnp.dot(adj, jnp.dot(x, w1, precision=hp), precision=hp), 0.0)
    h = jnp.maximum(jnp.dot(adj, jnp.dot(h, w2, precision=hp), precision=hp), 0.0)
    return jnp.dot(h, w3.T, precision=hp) + b3


if __name__ == "__main__":
    # Small, deterministic synthetic problem consistent with GNNp's __init__:
    #   opt['class_num'] = 8, opt['hidden_dim'] = 32, N = 128 nodes.
    N, CLASS_NUM, HIDDEN = 128, 8, 32

    key = jax.random.PRNGKey(0)
    k_x, k_a, k_w1, k_w2, k_w3, k_b3 = jax.random.split(key, 6)

    # Input node "soft label" features.
    x = jax.random.uniform(k_x, (N, CLASS_NUM), dtype=jnp.float32)

    # Dense row-normalized adjacency (symmetric random graph + self loops).
    a = (jax.random.uniform(k_a, (N, N)) < 0.05).astype(jnp.float32)
    a = jnp.maximum(a, a.T) + jnp.eye(N, dtype=jnp.float32)
    adj = a / jnp.sum(a, axis=1, keepdims=True)

    # GConv weights (uniform(-stdv, stdv), stdv = 1/sqrt(out), as in GMNN reset).
    stdv = 1.0 / jnp.sqrt(float(HIDDEN))
    w1 = jax.random.uniform(k_w1, (CLASS_NUM, HIDDEN), minval=-stdv, maxval=stdv,
                            dtype=jnp.float32)
    w2 = jax.random.uniform(k_w2, (HIDDEN, HIDDEN), minval=-stdv, maxval=stdv,
                            dtype=jnp.float32)

    # nn.Linear(hidden_dim, class_num): weight [C, H], bias [C].
    w3 = jax.random.uniform(k_w3, (CLASS_NUM, HIDDEN), minval=-stdv, maxval=stdv,
                            dtype=jnp.float32)
    b3 = jax.random.uniform(k_b3, (CLASS_NUM,), minval=-stdv, maxval=stdv,
                            dtype=jnp.float32)

    # Constant-operand preprocessing happens exactly once, outside the jit.
    adj_c, w_packed, b3_row = prepare_gnnp_params(adj, w1, w2, w3, b3)
    adj_c, w_packed, b3_row = jax.block_until_ready((adj_c, w_packed, b3_row))

    out = gnnp_forward(x, adj_c, w_packed, b3_row)
    out = jax.block_until_ready(out)
    assert out.shape == (N, CLASS_NUM)
    assert bool(jnp.all(jnp.isfinite(out)))

    # Check against the exact-f32 reference.  Tolerance covers the (possible)
    # reduced-precision f32 matmul passes of the TPU MXU; real semantic bugs
    # produce errors orders of magnitude larger.
    ref = reference_forward_f32(x, adj, w1, w2, w3, b3)
    max_err = float(jnp.max(jnp.abs(out - ref)))
    assert max_err < 2e-2, max_err

    print("KERNEL_OK")
</pallas_src>

<mosaic_0001>
module attributes {stable_mosaic.version = 11 : i64} {
  func.func @gnnp_kernel(%arg0: memref<128x8xf32, #tpu.memory_space<vmem>>, %arg1: memref<128x128xf32, #tpu.memory_space<vmem>>, %arg2: memref<3x32x32xf32, #tpu.memory_space<vmem>>, %arg3: memref<1x8xf32, #tpu.memory_space<vmem>>, %arg4: memref<128x8xf32, #tpu.memory_space<vmem>>) attributes {dimension_semantics = [], scalar_prefetch = 0 : i64, scratch_operands = 0 : i64, tpu.core_type = #tpu.core_type<tc>} {
    %c0 = arith.constant 0 : index
    %c0_0 = arith.constant 0 : index
    %0 = vector.load %arg0[%c0, %c0_0] : memref<128x8xf32, #tpu.memory_space<vmem>>, vector<128x8xf32>
    %c0_1 = arith.constant 0 : index
    %c0_2 = arith.constant 0 : index
    %1 = vector.load %arg1[%c0_1, %c0_2] : memref<128x128xf32, #tpu.memory_space<vmem>>, vector<128x128xf32>
    %c0_3 = arith.constant 0 : index
    %c0_4 = arith.constant 0 : index
    %c0_5 = arith.constant 0 : index
    %2 = vector.load %arg2[%c0_3, %c0_4, %c0_5] : memref<3x32x32xf32, #tpu.memory_space<vmem>>, vector<1x32x32xf32>
    %3 = vector.shape_cast %2 : vector<1x32x32xf32> to vector<32x32xf32>
    %4 = vector.extract_strided_slice %3 {offsets = [0, 0], sizes = [8, 32], strides = [1, 1]} : vector<32x32xf32> to vector<8x32xf32>
    %c1 = arith.constant 1 : index
    %c0_6 = arith.constant 0 : index
    %c0_7 = arith.constant 0 : index
    %5 = vector.load %arg2[%c1, %c0_6, %c0_7] : memref<3x32x32xf32, #tpu.memory_space<vmem>>, vector<1x32x32xf32>
    %6 = vector.shape_cast %5 : vector<1x32x32xf32> to vector<32x32xf32>
    %c2 = arith.constant 2 : index
    %c0_8 = arith.constant 0 : index
    %c0_9 = arith.constant 0 : index
    %7 = vector.load %arg2[%c2, %c0_8, %c0_9] : memref<3x32x32xf32, #tpu.memory_space<vmem>>, vector<1x32x32xf32>
    %8 = vector.shape_cast %7 : vector<1x32x32xf32> to vector<32x32xf32>
    %9 = vector.extract_strided_slice %8 {offsets = [0, 0], sizes = [32, 8], strides = [1, 1]} : vector<32x32xf32> to vector<32x8xf32>
    %cst = arith.constant dense<0.000000e+00> : vector<128x8xf32>
    %10 = tpu.matmul %1, %0, %cst {dimension_numbers = #tpu.dot_dimension_numbers<[1], [0], [0], [1], [0, 0, 1, 1], [], []>} : vector<128x128xf32>, vector<128x8xf32>, vector<128x8xf32> -> vector<128x8xf32>
    %cst_10 = arith.constant dense<0.000000e+00> : vector<128x32xf32>
    %11 = tpu.matmul %10, %4, %cst_10 {dimension_numbers = #tpu.dot_dimension_numbers<[1], [0], [0], [1], [0, 0, 1, 1], [], []>} : vector<128x8xf32>, vector<8x32xf32>, vector<128x32xf32> -> vector<128x32xf32>
    %cst_11 = arith.constant 0.000000e+00 : f32
    %12 = vector.broadcast %cst_11 : f32 to vector<128x32xf32>
    %13 = arith.maximumf %11, %12 : vector<128x32xf32>
    %cst_12 = arith.constant dense<0.000000e+00> : vector<128x32xf32>
    %14 = tpu.matmul %13, %6, %cst_12 {dimension_numbers = #tpu.dot_dimension_numbers<[1], [0], [0], [1], [0, 0, 1, 1], [], []>} : vector<128x32xf32>, vector<32x32xf32>, vector<128x32xf32> -> vector<128x32xf32>
    %cst_13 = arith.constant dense<0.000000e+00> : vector<128x32xf32>
    %15 = tpu.matmul %1, %14, %cst_13 {dimension_numbers = #tpu.dot_dimension_numbers<[1], [0], [0], [1], [0, 0, 1, 1], [], []>} : vector<128x128xf32>, vector<128x32xf32>, vector<128x32xf32> -> vector<128x32xf32>
    %cst_14 = arith.constant 0.000000e+00 : f32
    %16 = vector.broadcast %cst_14 : f32 to vector<128x32xf32>
    %17 = arith.maximumf %15, %16 : vector<128x32xf32>
    %cst_15 = arith.constant dense<0.000000e+00> : vector<128x8xf32>
    %18 = tpu.matmul %17, %9, %cst_15 {dimension_numbers = #tpu.dot_dimension_numbers<[1], [0], [0], [1], [0, 0, 1, 1], [], []>} : vector<128x32xf32>, vector<32x8xf32>, vector<128x8xf32> -> vector<128x8xf32>
    %c0_16 = arith.constant 0 : index
    %c0_17 = arith.constant 0 : index
    %19 = vector.load %arg3[%c0_16, %c0_17] : memref<1x8xf32, #tpu.memory_space<vmem>>, vector<1x8xf32>
    %20 = vector.broadcast %19 : vector<1x8xf32> to vector<128x8xf32>
    %21 = arith.addf %18, %20 : vector<128x8xf32>
    %c0_18 = arith.constant 0 : index
    %c0_19 = arith.constant 0 : index
    %22 = vector.load %arg4[%c0_18, %c0_19] : memref<128x8xf32, #tpu.memory_space<vmem>>, vector<128x8xf32>
    tpu.vector_store %arg4[%c0_18, %c0_19], %21 {strides = array<i32>} : memref<128x8xf32, #tpu.memory_space<vmem>>, vector<128x8xf32>,
    return
  }
}

</mosaic_0001>

<llo_original>
// kernel: gnnp_forward.1
$region0: #{gnnp_forward.1}
  #allocation0 [shape = 'u32[]', space=smem, size = 0x4, offset = 0x4, fixed_abs, tag = 'smem constant byte address 0x4 - core index']
  #allocation1 [shape = 'u32[72,128]{1,0:T(1,128)}', space=vmem, size = 0x9000, scoped, tag = 'internal scratch']
  %s0 = inlined_call_operand.vmem [shape: f32[128,8], index: 0, kind: input, shape index: {}]
  %s1 = inlined_call_operand.vmem [shape: f32[128,128], index: 1, kind: input, shape index: {}]
  %s2 = inlined_call_operand.hbm [shape: f32[3,32,32], index: 2, kind: input, shape index: {}]
  %s3 = inlined_call_operand.vmem [shape: f32[1,8], index: 3, kind: input, shape index: {}]
  %s4 = inlined_call_operand.vmem [shape: f32[128,8], index: 4, kind: output, shape index: {}]
  %s5 = sld [smem:[#allocation0]]
  $region30: #{gnnp_forward.1} parent=0
    _
  %s7 = ssub.s32 1, %s5
  %s8 = scalar_select 0, %s7, %s5
  $region1: #{gnnp_forward.1} parent=0
    #allocation2 [shape = 'u8[49152]{0}', space=vmem, size = 0xc000, scoped, tag = 'input window, operand 2, single buffered']
    #allocation3 [shape = 's32[1]{0}', space=sflag, size = 0x4, scoped, tag = 'scoped memory for gnnp_forward.1']
    %9 = vsyncpa [#allocation3], 0
    // Predicated region
    $region2: #{gnnp_forward.1} parent=1 // pred_check
      _
    $region3: #{gnnp_forward.1} parent=1 // pred_check_branch
      %11 = sbr.rel (0) target = $region5
    $region4: #{gnnp_forward.1} parent=1 // pred_region
      _
    $region5: #{gnnp_forward.1} parent=1 // pred_fallthru
      _
    // Predicated region
    $region6: #{gnnp_forward.1} parent=1 // pred_check
      _
    $region7: #{gnnp_forward.1} parent=1 // pred_check_branch
      %13 = sbr.rel (0) target = $region9
    $region8: #{gnnp_forward.1} parent=1 // pred_region
      _
    $region9: #{gnnp_forward.1} parent=1 // pred_fallthru
      _
    // Predicated region
    $region10: #{gnnp_forward.1} parent=1 // pred_check
      _
    $region11: #{gnnp_forward.1} parent=1 // pred_check_branch
      %15 = sbr.rel (0) target = $region13
    $region12: #{gnnp_forward.1} parent=1 // pred_region
      %17 = vsyncadd [#allocation3], 0
      %s18 = sshll.u32 %s2, 4
      %s19 = int_to_ptr.hbm [resolvable:$true] %s18
      %s20 = sshll.u32 [#allocation2], 4
      %s21 = int_to_ptr.vmem [resolvable:$true] %s20
      %26 = dma.hbm_to_vmem [thread:$0]  %s19, 1536, %s21, [#allocation3], 128, 128, 8
    $region13: #{gnnp_forward.1} parent=1 // pred_fallthru
      _
    // Predicated region
    $region14: #{gnnp_forward.1} parent=1 // pred_check
      _
    $region15: #{gnnp_forward.1} parent=1 // pred_check_branch
      %28 = sbr.rel (0) target = $region17
    $region16: #{gnnp_forward.1} parent=1 // pred_region
      _
    $region17: #{gnnp_forward.1} parent=1 // pred_fallthru
      _
    // Predicated region
    $region18: #{gnnp_forward.1} parent=1 // pred_check
      _
    $region19: #{gnnp_forward.1} parent=1 // pred_check_branch
      %30 = sbr.rel (0) target = $region21
    $region20: #{gnnp_forward.1} parent=1 // pred_region
      %32 = dma.done [#allocation3], 1536
    $region21: #{gnnp_forward.1} parent=1 // pred_fallthru
      _
    %v33 = vld [vmem:[%s0] sm:$0xff]
    %v34 = vld [vmem:[%s0 + $0x8] sm:$0xff]
    %v35 = vld [vmem:[%s0 + $0x10] sm:$0xff]
    %v36 = vld [vmem:[%s0 + $0x18] sm:$0xff]
    %v37 = vld [vmem:[%s0 + $0x20] sm:$0xff]
    %v38 = vld [vmem:[%s0 + $0x28] sm:$0xff]
    %v39 = vld [vmem:[%s0 + $0x30] sm:$0xff]
    %v40 = vld [vmem:[%s0 + $0x38] sm:$0xff]
    %v41 = vld [vmem:[%s0 + $0x40] sm:$0xff]
    %v42 = vld [vmem:[%s0 + $0x48] sm:$0xff]
    %v43 = vld [vmem:[%s0 + $0x50] sm:$0xff]
    %v44 = vld [vmem:[%s0 + $0x58] sm:$0xff]
    %v45 = vld [vmem:[%s0 + $0x60] sm:$0xff]
    %v46 = vld [vmem:[%s0 + $0x68] sm:$0xff]
    %v47 = vld [vmem:[%s0 + $0x70] sm:$0xff]
    %v48 = vld [vmem:[%s0 + $0x78] sm:$0xff]
    %v49 = vld [vmem:[%s1] sm:$0xff]
    %v50 = vld [vmem:[%s1 + $0x8] sm:$0xff]
    %v51 = vld [vmem:[%s1 + $0x10] sm:$0xff]
    %v52 = vld [vmem:[%s1 + $0x18] sm:$0xff]
    %v53 = vld [vmem:[%s1 + $0x20] sm:$0xff]
    %v54 = vld [vmem:[%s1 + $0x28] sm:$0xff]
    %v55 = vld [vmem:[%s1 + $0x30] sm:$0xff]
    %v56 = vld [vmem:[%s1 + $0x38] sm:$0xff]
    %v57 = vld [vmem:[%s1 + $0x40] sm:$0xff]
    %v58 = vld [vmem:[%s1 + $0x48] sm:$0xff]
    %v59 = vld [vmem:[%s1 + $0x50] sm:$0xff]
    %v60 = vld [vmem:[%s1 + $0x58] sm:$0xff]
    %v61 = vld [vmem:[%s1 + $0x60] sm:$0xff]
    %v62 = vld [vmem:[%s1 + $0x68] sm:$0xff]
    %v63 = vld [vmem:[%s1 + $0x70] sm:$0xff]
    %v64 = vld [vmem:[%s1 + $0x78] sm:$0xff]
    %v65 = vld [vmem:[#allocation2] sm:$0xff]
    %s66 = scalar_lea.vmem [#allocation2], 32
    %v67 = vld [vmem:[%s66] sm:$0xff]
    %v68 = vld [vmem:[%s66 + $0x8] sm:$0xff]
    %v69 = vld [vmem:[%s66 + $0x10] sm:$0xff]
    %v70 = vld [vmem:[%s66 + $0x18] sm:$0xff]
    %s71 = scalar_lea.vmem [#allocation2], 64
    %v72 = vld [vmem:[%s71] sm:$0xff]
    %v73 = vld [vmem:[%s71 + $0x8] sm:$0xff]
    %v74 = vld [vmem:[%s71 + $0x10] sm:$0xff]
    %v75 = vld [vmem:[%s71 + $0x18] sm:$0xff]
    %76 = vmatpush.msra.mxu0 %v48
    %77 = vmatpush.msra.mxu0 %v47
    %78 = vmatpush.msra.mxu0 %v46
    %79 = vmatpush.msra.mxu0 %v45
    %80 = vmatpush.msra.mxu0 %v44
    %81 = vmatpush.msra.mxu0 %v43
    %82 = vmatpush.msra.mxu0 %v42
    %83 = vmatpush.msra.mxu0 %v41
    %84 = vmatpush.msra.mxu0 %v40
    %85 = vmatpush.msra.mxu0 %v39
    %86 = vmatpush.msra.mxu0 %v38
    %87 = vmatpush.msra.mxu0 %v37
    %88 = vmatpush.msra.mxu0 %v36
    %89 = vmatpush.msra.mxu0 %v35
    %90 = vmatpush.msra.mxu0 %v34
    %91 = vmatpush.msra.mxu0 %v33
    %92 = vmatmul.f32.gmra.mxu0 %v49
    %v93 = vpop.f32.mrf.mxu0
    %v94 = vadd.f32 0.0, %v93
    %95 = vmatmul.f32.gmra.mxu0 %v50
    %v96 = vpop.f32.mrf.mxu0
    %v97 = vadd.f32 0.0, %v96
    %98 = vmatmul.f32.gmra.mxu0 %v51
    %v99 = vpop.f32.mrf.mxu0
    %v100 = vadd.f32 0.0, %v99
    %101 = vmatmul.f32.gmra.mxu0 %v52
    %v102 = vpop.f32.mrf.mxu0
    %v103 = vadd.f32 0.0, %v102
    %104 = vmatmul.f32.gmra.mxu0 %v53
    %v105 = vpop.f32.mrf.mxu0
    %v106 = vadd.f32 0.0, %v105
    %107 = vmatmul.f32.gmra.mxu0 %v54
    %v108 = vpop.f32.mrf.mxu0
    %v109 = vadd.f32 0.0, %v108
    %110 = vmatmul.f32.gmra.mxu0 %v55
    %v111 = vpop.f32.mrf.mxu0
    %v112 = vadd.f32 0.0, %v111
    %113 = vmatmul.f32.gmra.mxu0 %v56
    %v114 = vpop.f32.mrf.mxu0
    %v115 = vadd.f32 0.0, %v114
    %116 = vmatmul.f32.gmra.mxu0 %v57
    %v117 = vpop.f32.mrf.mxu0
    %v118 = vadd.f32 0.0, %v117
    %119 = vmatmul.f32.gmra.mxu0 %v58
    %v120 = vpop.f32.mrf.mxu0
    %v121 = vadd.f32 0.0, %v120
    %122 = vmatmul.f32.gmra.mxu0 %v59
    %v123 = vpop.f32.mrf.mxu0
    %v124 = vadd.f32 0.0, %v123
    %125 = vmatmul.f32.gmra.mxu0 %v60
    %v126 = vpop.f32.mrf.mxu0
    %v127 = vadd.f32 0.0, %v126
    %128 = vmatmul.f32.gmra.mxu0 %v61
    %v129 = vpop.f32.mrf.mxu0
    %v130 = vadd.f32 0.0, %v129
    %131 = vmatmul.f32.gmra.mxu0 %v62
    %v132 = vpop.f32.mrf.mxu0
    %v133 = vadd.f32 0.0, %v132
    %134 = vmatmul.f32.gmra.mxu0 %v63
    %v135 = vpop.f32.mrf.mxu0
    %v136 = vadd.f32 0.0, %v135
    %137 = vmatmul.f32.gmra.mxu0 %v64
    %v138 = vpop.f32.mrf.mxu0
    %v139 = vadd.f32 0.0, %v138
    %140 = vdwg.mxu0
    %vm141 = vcmask 64512
    %v143 = vsel %vm141, %v94, 0
    %v146 = vsel %vm141, %v97, 0
    %v149 = vsel %vm141, %v100, 0
    %v152 = vsel %vm141, %v103, 0
    %v155 = vsel %vm141, %v106, 0
    %v158 = vsel %vm141, %v109, 0
    %v161 = vsel %vm141, %v112, 0
    %v164 = vsel %vm141, %v115, 0
    %v167 = vsel %vm141, %v118, 0
    %v170 = vsel %vm141, %v121, 0
    %v173 = vsel %vm141, %v124, 0
    %v176 = vsel %vm141, %v127, 0
    %v179 = vsel %vm141, %v130, 0
    %v182 = vsel %vm141, %v133, 0
    %v185 = vsel %vm141, %v136, 0
    %v188 = vsel %vm141, %v139, 0
    %190 = vmatpush.msra.mxu0 0.0
    %191 = vmatpush.msra.mxu0 0.0
    %192 = vmatpush.msra.mxu0 0.0
    %193 = vmatpush.msra.mxu0 0.0
    %194 = vmatpush.msra.mxu0 0.0
    %195 = vmatpush.msra.mxu0 0.0
    %196 = vmatpush.msra.mxu0 0.0
    %197 = vmatpush.msra.mxu0 0.0
    %198 = vmatpush.msra.mxu0 0.0
    %199 = vmatpush.msra.mxu0 0.0
    %200 = vmatpush.msra.mxu0 0.0
    %201 = vmatpush.msra.mxu0 0.0
    %202 = vmatpush.msra.mxu0 0.0
    %203 = vmatpush.msra.mxu0 0.0
    %204 = vmatpush.msra.mxu0 0.0
    %205 = vmatpush.msra.mxu0 %v65
    %206 = vmatmul.f32.gmra.mxu0 %v143
    %v207 = vpop.f32.mrf.mxu0
    %v208 = vadd.f32 0.0, %v207
    %209 = vmatmul.f32.gmra.mxu0 %v146
    %v210 = vpop.f32.mrf.mxu0
    %v211 = vadd.f32 0.0, %v210
    %212 = vmatmul.f32.gmra.mxu0 %v149
    %v213 = vpop.f32.mrf.mxu0
    %v214 = vadd.f32 0.0, %v213
    %215 = vmatmul.f32.gmra.mxu0 %v152
    %v216 = vpop.f32.mrf.mxu0
    %v217 = vadd.f32 0.0, %v216
    %218 = vmatmul.f32.gmra.mxu0 %v155
    %v219 = vpop.f32.mrf.mxu0
    %v220 = vadd.f32 0.0, %v219
    %221 = vmatmul.f32.gmra.mxu0 %v158
    %v222 = vpop.f32.mrf.mxu0
    %v223 = vadd.f32 0.0, %v222
    %224 = vmatmul.f32.gmra.mxu0 %v161
    %v225 = vpop.f32.mrf.mxu0
    %v226 = vadd.f32 0.0, %v225
    %227 = vmatmul.f32.gmra.mxu0 %v164
    %v228 = vpop.f32.mrf.mxu0
    %v229 = vadd.f32 0.0, %v228
    %230 = vmatmul.f32.gmra.mxu0 %v167
    %v231 = vpop.f32.mrf.mxu0
    %v232 = vadd.f32 0.0, %v231
    %233 = vmatmul.f32.gmra.mxu0 %v170
    %v234 = vpop.f32.mrf.mxu0
    %v235 = vadd.f32 0.0, %v234
    %236 = vmatmul.f32.gmra.mxu0 %v173
    %v237 = vpop.f32.mrf.mxu0
    %v238 = vadd.f32 0.0, %v237
    %239 = vmatmul.f32.gmra.mxu0 %v176
    %v240 = vpop.f32.mrf.mxu0
    %v241 = vadd.f32 0.0, %v240
    %242 = vmatmul.f32.gmra.mxu0 %v179
    %v243 = vpop.f32.mrf.mxu0
    %v244 = vadd.f32 0.0, %v243
    %245 = vmatmul.f32.gmra.mxu0 %v182
    %v246 = vpop.f32.mrf.mxu0
    %v247 = vadd.f32 0.0, %v246
    %248 = vmatmul.f32.gmra.mxu0 %v185
    %v249 = vpop.f32.mrf.mxu0
    %v250 = vadd.f32 0.0, %v249
    %251 = vmatmul.f32.gmra.mxu0 %v188
    %v252 = vpop.f32.mrf.mxu0
    %v253 = vadd.f32 0.0, %v252
    %254 = vdwg.mxu0
    %v255 = vmax.f32 %v208, 0.0
    %v256 = vmax.f32 %v211, 0.0
    %v257 = vmax.f32 %v214, 0.0
    %v258 = vmax.f32 %v217, 0.0
    %v259 = vmax.f32 %v220, 0.0
    %v260 = vmax.f32 %v223, 0.0
    %v261 = vmax.f32 %v226, 0.0
    %v262 = vmax.f32 %v229, 0.0
    %v263 = vmax.f32 %v232, 0.0
    %v264 = vmax.f32 %v235, 0.0
    %v265 = vmax.f32 %v238, 0.0
    %v266 = vmax.f32 %v241, 0.0
    %v267 = vmax.f32 %v244, 0.0
    %v268 = vmax.f32 %v247, 0.0
    %v269 = vmax.f32 %v250, 0.0
    %v270 = vmax.f32 %v253, 0.0
    %vm271 = vcmask 261120
    %v273 = vsel %vm271, %v255, 0
    %v276 = vsel %vm271, %v256, 0
    %v279 = vsel %vm271, %v257, 0
    %v282 = vsel %vm271, %v258, 0
    %v285 = vsel %vm271, %v259, 0
    %v288 = vsel %vm271, %v260, 0
    %v291 = vsel %vm271, %v261, 0
    %v294 = vsel %vm271, %v262, 0
    %v297 = vsel %vm271, %v263, 0
    %v300 = vsel %vm271, %v264, 0
    %v303 = vsel %vm271, %v265, 0
    %v306 = vsel %vm271, %v266, 0
    %v309 = vsel %vm271, %v267, 0
    %v312 = vsel %vm271, %v268, 0
    %v315 = vsel %vm271, %v269, 0
    %v318 = vsel %vm271, %v270, 0
    %320 = vmatpush.msra.mxu0 0.0
    %321 = vmatpush.msra.mxu0 0.0
    %322 = vmatpush.msra.mxu0 0.0
    %323 = vmatpush.msra.mxu0 0.0
    %324 = vmatpush.msra.mxu0 0.0
    %325 = vmatpush.msra.mxu0 0.0
    %326 = vmatpush.msra.mxu0 0.0
    %327 = vmatpush.msra.mxu0 0.0
    %328 = vmatpush.msra.mxu0 0.0
    %329 = vmatpush.msra.mxu0 0.0
    %330 = vmatpush.msra.mxu0 0.0
    %331 = vmatpush.msra.mxu0 0.0
    %332 = vmatpush.msra.mxu0 %v70
    %333 = vmatpush.msra.mxu0 %v69
    %334 = vmatpush.msra.mxu0 %v68
    %335 = vmatpush.msra.mxu0 %v67
    %336 = vmatmul.f32.gmra.mxu0 %v273
    %v337 = vpop.f32.mrf.mxu0
    %v338 = vadd.f32 0.0, %v337
    %339 = vmatmul.f32.gmra.mxu0 %v276
    %v340 = vpop.f32.mrf.mxu0
    %v341 = vadd.f32 0.0, %v340
    %342 = vmatmul.f32.gmra.mxu0 %v279
    %v343 = vpop.f32.mrf.mxu0
    %v344 = vadd.f32 0.0, %v343
    %345 = vmatmul.f32.gmra.mxu0 %v282
    %v346 = vpop.f32.mrf.mxu0
    %v347 = vadd.f32 0.0, %v346
    %348 = vmatmul.f32.gmra.mxu0 %v285
    %v349 = vpop.f32.mrf.mxu0
    %v350 = vadd.f32 0.0, %v349
    %351 = vmatmul.f32.gmra.mxu0 %v288
    %v352 = vpop.f32.mrf.mxu0
    %v353 = vadd.f32 0.0, %v352
    %354 = vmatmul.f32.gmra.mxu0 %v291
    %v355 = vpop.f32.mrf.mxu0
    %v356 = vadd.f32 0.0, %v355
    %357 = vmatmul.f32.gmra.mxu0 %v294
    %v358 = vpop.f32.mrf.mxu0
    %v359 = vadd.f32 0.0, %v358
    %360 = vmatmul.f32.gmra.mxu0 %v297
    %v361 = vpop.f32.mrf.mxu0
    %v362 = vadd.f32 0.0, %v361
    %363 = vmatmul.f32.gmra.mxu0 %v300
    %v364 = vpop.f32.mrf.mxu0
    %v365 = vadd.f32 0.0, %v364
    %366 = vmatmul.f32.gmra.mxu0 %v303
    %v367 = vpop.f32.mrf.mxu0
    %v368 = vadd.f32 0.0, %v367
    %369 = vmatmul.f32.gmra.mxu0 %v306
    %v370 = vpop.f32.mrf.mxu0
    %v371 = vadd.f32 0.0, %v370
    %372 = vmatmul.f32.gmra.mxu0 %v309
    %v373 = vpop.f32.mrf.mxu0
    %v374 = vadd.f32 0.0, %v373
    %375 = vmatmul.f32.gmra.mxu0 %v312
    %v376 = vpop.f32.mrf.mxu0
    %v377 = vadd.f32 0.0, %v376
    %378 = vmatmul.f32.gmra.mxu0 %v315
    %v379 = vpop.f32.mrf.mxu0
    %v380 = vadd.f32 0.0, %v379
    %381 = vmatmul.f32.gmra.mxu0 %v318
    %v382 = vpop.f32.mrf.mxu0
    %v383 = vadd.f32 0.0, %v382
    %384 = vdwg.mxu0
    %385 = vmatpush.msra.mxu0 %v383
    %386 = vmatpush.msra.mxu0 %v380
    %387 = vmatpush.msra.mxu0 %v377
    %388 = vmatpush.msra.mxu0 %v374
    %389 = vmatpush.msra.mxu0 %v371
    %390 = vmatpush.msra.mxu0 %v368
    %391 = vmatpush.msra.mxu0 %v365
    %392 = vmatpush.msra.mxu0 %v362
    %393 = vmatpush.msra.mxu0 %v359
    %394 = vmatpush.msra.mxu0 %v356
    %395 = vmatpush.msra.mxu0 %v353
    %396 = vmatpush.msra.mxu0 %v350
    %397 = vmatpush.msra.mxu0 %v347
    %398 = vmatpush.msra.mxu0 %v344
    %399 = vmatpush.msra.mxu0 %v341
    %400 = vmatpush.msra.mxu0 %v338
    %401 = vmatmul.f32.gmra.mxu0 %v49
    %v402 = vpop.f32.mrf.mxu0
    %v403 = vadd.f32 0.0, %v402
    %404 = vmatmul.f32.gmra.mxu0 %v50
    %v405 = vpop.f32.mrf.mxu0
    %v406 = vadd.f32 0.0, %v405
    %407 = vmatmul.f32.gmra.mxu0 %v51
    %v408 = vpop.f32.mrf.mxu0
    %v409 = vadd.f32 0.0, %v408
    %410 = vmatmul.f32.gmra.mxu0 %v52
    %v411 = vpop.f32.mrf.mxu0
    %v412 = vadd.f32 0.0, %v411
    %413 = vmatmul.f32.gmra.mxu0 %v53
    %v414 = vpop.f32.mrf.mxu0
    %v415 = vadd.f32 0.0, %v414
    %416 = vmatmul.f32.gmra.mxu0 %v54
    %v417 = vpop.f32.mrf.mxu0
    %v418 = vadd.f32 0.0, %v417
    %419 = vmatmul.f32.gmra.mxu0 %v55
    %v420 = vpop.f32.mrf.mxu0
    %v421 = vadd.f32 0.0, %v420
    %422 = vmatmul.f32.gmra.mxu0 %v56
    %v423 = vpop.f32.mrf.mxu0
    %v424 = vadd.f32 0.0, %v423
    %425 = vmatmul.f32.gmra.mxu0 %v57
    %v426 = vpop.f32.mrf.mxu0
    %v427 = vadd.f32 0.0, %v426
    %428 = vmatmul.f32.gmra.mxu0 %v58
    %v429 = vpop.f32.mrf.mxu0
    %v430 = vadd.f32 0.0, %v429
    %431 = vmatmul.f32.gmra.mxu0 %v59
    %v432 = vpop.f32.mrf.mxu0
    %v433 = vadd.f32 0.0, %v432
    %434 = vmatmul.f32.gmra.mxu0 %v60
    %v435 = vpop.f32.mrf.mxu0
    %v436 = vadd.f32 0.0, %v435
    %437 = vmatmul.f32.gmra.mxu0 %v61
    %v438 = vpop.f32.mrf.mxu0
    %v439 = vadd.f32 0.0, %v438
    %440 = vmatmul.f32.gmra.mxu0 %v62
    %v441 = vpop.f32.mrf.mxu0
    %v442 = vadd.f32 0.0, %v441
    %443 = vmatmul.f32.gmra.mxu0 %v63
    %v444 = vpop.f32.mrf.mxu0
    %v445 = vadd.f32 0.0, %v444
    %446 = vmatmul.f32.gmra.mxu0 %v64
    %v447 = vpop.f32.mrf.mxu0
    %v448 = vadd.f32 0.0, %v447
    %449 = vdwg.mxu0
    %v450 = vmax.f32 %v403, 0.0
    %v451 = vmax.f32 %v406, 0.0
    %v452 = vmax.f32 %v409, 0.0
    %v453 = vmax.f32 %v412, 0.0
    %v454 = vmax.f32 %v415, 0.0
    %v455 = vmax.f32 %v418, 0.0
    %v456 = vmax.f32 %v421, 0.0
    %v457 = vmax.f32 %v424, 0.0
    %v458 = vmax.f32 %v427, 0.0
    %v459 = vmax.f32 %v430, 0.0
    %v460 = vmax.f32 %v433, 0.0
    %v461 = vmax.f32 %v436, 0.0
    %v462 = vmax.f32 %v439, 0.0
    %v463 = vmax.f32 %v442, 0.0
    %v464 = vmax.f32 %v445, 0.0
    %v465 = vmax.f32 %v448, 0.0
    %v466 = vld [vmem:[%s3] sm:$0x1]
    %v468 = vperm.slane %v466, 0
    %v471 = vsel %vm271, %v450, 0
    %v474 = vsel %vm271, %v451, 0
    %v477 = vsel %vm271, %v452, 0
    %v480 = vsel %vm271, %v453, 0
    %v483 = vsel %vm271, %v454, 0
    %v486 = vsel %vm271, %v455, 0
    %v489 = vsel %vm271, %v456, 0
    %v492 = vsel %vm271, %v457, 0
    %v495 = vsel %vm271, %v458, 0
    %v498 = vsel %vm271, %v459, 0
    %v501 = vsel %vm271, %v460, 0
    %v504 = vsel %vm271, %v461, 0
    %v507 = vsel %vm271, %v462, 0
    %v510 = vsel %vm271, %v463, 0
    %v513 = vsel %vm271, %v464, 0
    %v516 = vsel %vm271, %v465, 0
    %518 = vmatpush.msra.mxu0 0.0
    %519 = vmatpush.msra.mxu0 0.0
    %520 = vmatpush.msra.mxu0 0.0
    %521 = vmatpush.msra.mxu0 0.0
    %522 = vmatpush.msra.mxu0 0.0
    %523 = vmatpush.msra.mxu0 0.0
    %524 = vmatpush.msra.mxu0 0.0
    %525 = vmatpush.msra.mxu0 0.0
    %526 = vmatpush.msra.mxu0 0.0
    %527 = vmatpush.msra.mxu0 0.0
    %528 = vmatpush.msra.mxu0 0.0
    %529 = vmatpush.msra.mxu0 0.0
    %530 = vmatpush.msra.mxu0 %v75
    %531 = vmatpush.msra.mxu0 %v74
    %532 = vmatpush.msra.mxu0 %v73
    %533 = vmatpush.msra.mxu0 %v72
    %534 = vmatmul.f32.gmra.mxu0 %v471
    %v535 = vpop.f32.mrf.mxu0
    %v536 = vadd.f32 %v468, %v535
    %537 = vmatmul.f32.gmra.mxu0 %v474
    %v538 = vpop.f32.mrf.mxu0
    %v539 = vadd.f32 %v468, %v538
    %540 = vmatmul.f32.gmra.mxu0 %v477
    %v541 = vpop.f32.mrf.mxu0
    %v542 = vadd.f32 %v468, %v541
    %543 = vmatmul.f32.gmra.mxu0 %v480
    %v544 = vpop.f32.mrf.mxu0
    %v545 = vadd.f32 %v468, %v544
    %546 = vmatmul.f32.gmra.mxu0 %v483
    %v547 = vpop.f32.mrf.mxu0
    %v548 = vadd.f32 %v468, %v547
    %549 = vmatmul.f32.gmra.mxu0 %v486
    %v550 = vpop.f32.mrf.mxu0
    %v551 = vadd.f32 %v468, %v550
    %552 = vmatmul.f32.gmra.mxu0 %v489
    %v553 = vpop.f32.mrf.mxu0
    %v554 = vadd.f32 %v468, %v553
    %555 = vmatmul.f32.gmra.mxu0 %v492
    %v556 = vpop.f32.mrf.mxu0
    %v557 = vadd.f32 %v468, %v556
    %558 = vmatmul.f32.gmra.mxu0 %v495
    %v559 = vpop.f32.mrf.mxu0
    %v560 = vadd.f32 %v468, %v559
    %561 = vmatmul.f32.gmra.mxu0 %v498
    %v562 = vpop.f32.mrf.mxu0
    %v563 = vadd.f32 %v468, %v562
    %564 = vmatmul.f32.gmra.mxu0 %v501
    %v565 = vpop.f32.mrf.mxu0
    %v566 = vadd.f32 %v468, %v565
    %567 = vmatmul.f32.gmra.mxu0 %v504
    %v568 = vpop.f32.mrf.mxu0
    %v569 = vadd.f32 %v468, %v568
    %570 = vmatmul.f32.gmra.mxu0 %v507
    %v571 = vpop.f32.mrf.mxu0
    %v572 = vadd.f32 %v468, %v571
    %573 = vmatmul.f32.gmra.mxu0 %v510
    %v574 = vpop.f32.mrf.mxu0
    %v575 = vadd.f32 %v468, %v574
    %576 = vmatmul.f32.gmra.mxu0 %v513
    %v577 = vpop.f32.mrf.mxu0
    %v578 = vadd.f32 %v468, %v577
    %579 = vmatmul.f32.gmra.mxu0 %v516
    %v580 = vpop.f32.mrf.mxu0
    %v581 = vadd.f32 %v468, %v580
    %582 = vdwg.mxu0
    %583 = vst.msk [vmem:[%s4] sm:$0xff] %vm141, %v536
    %584 = vst.msk [vmem:[%s4 + $0x8] sm:$0xff] %vm141, %v539
    %585 = vst.msk [vmem:[%s4 + $0x10] sm:$0xff] %vm141, %v542
    %586 = vst.msk [vmem:[%s4 + $0x18] sm:$0xff] %vm141, %v545
    %587 = vst.msk [vmem:[%s4 + $0x20] sm:$0xff] %vm141, %v548
    %588 = vst.msk [vmem:[%s4 + $0x28] sm:$0xff] %vm141, %v551
    %589 = vst.msk [vmem:[%s4 + $0x30] sm:$0xff] %vm141, %v554
    %590 = vst.msk [vmem:[%s4 + $0x38] sm:$0xff] %vm141, %v557
    %591 = vst.msk [vmem:[%s4 + $0x40] sm:$0xff] %vm141, %v560
    %592 = vst.msk [vmem:[%s4 + $0x48] sm:$0xff] %vm141, %v563
    %593 = vst.msk [vmem:[%s4 + $0x50] sm:$0xff] %vm141, %v566
    %594 = vst.msk [vmem:[%s4 + $0x58] sm:$0xff] %vm141, %v569
    %595 = vst.msk [vmem:[%s4 + $0x60] sm:$0xff] %vm141, %v572
    %596 = vst.msk [vmem:[%s4 + $0x68] sm:$0xff] %vm141, %v575
    %597 = vst.msk [vmem:[%s4 + $0x70] sm:$0xff] %vm141, %v578
    %598 = vst.msk [vmem:[%s4 + $0x78] sm:$0xff] %vm141, %v581
    // Predicated region
    $region22: #{gnnp_forward.1} parent=1 // pred_check
      _
    $region23: #{gnnp_forward.1} parent=1 // pred_check_branch
      %600 = sbr.rel (0) target = $region25
    $region24: #{gnnp_forward.1} parent=1 // pred_region
      _
    $region25: #{gnnp_forward.1} parent=1 // pred_fallthru
      _
    // Predicated region
    $region26: #{gnnp_forward.1} parent=1 // pred_check
      _
    $region27: #{gnnp_forward.1} parent=1 // pred_check_branch
      %602 = sbr.rel (0) target = $region29
    $region28: #{gnnp_forward.1} parent=1 // pred_region
      _
    $region29: #{gnnp_forward.1} parent=1 // pred_fallthru
      _
    %603 = vsyncpa [#allocation3], 1

</llo_original>
